<compile_context>
chip_gen: v5e
topology: v5e:2x2
jax: 0.10.0
libtpu: 0.0.40
codegen_flags: <defaults>
</compile_context>

<pallas_src>
import functools

import jax
import jax.numpy as jnp
from jax.experimental import pallas as pl
from jax.experimental.pallas import tpu as pltpu

LANE = 128   # lane width: the hidden dim is padded to a multiple of this


def _round_up(n, m):
    return ((n + m - 1) // m) * m


def _qnet_kernel(x_ref, w1_ref, b1_ref, w2_ref, b2_ref, o_ref):
    # Layer 1: (TB, I) @ (I, Hp) -> f32 accum, + bias, ReLU.
    x = x_ref[...].astype(w1_ref.dtype)
    h = jnp.dot(x, w1_ref[...], preferred_element_type=jnp.float32)
    h = jnp.maximum(h + b1_ref[...], 0.0)
    # Layer 2: (TB, Hp) @ (Hp, O) -> f32 accum, + bias.
    out = jnp.dot(h.astype(w2_ref.dtype), w2_ref[...],
                  preferred_element_type=jnp.float32)
    o_ref[...] = (out + b2_ref[...]).astype(o_ref.dtype)


@functools.partial(jax.jit, static_argnames=("block_b",))
def linear_qnet_forward(x, w1p, b1p, w2p, b2p, *, block_b=2048):
    """Forward pass. Params must already be hidden-dim-padded (pad_params)."""
    B, I = x.shape
    Ip, Hp = w1p.shape
    assert I == Ip, "x feature dim must match W1 rows (no input padding)"
    O = w2p.shape[1]

    # Batch-tile granularity: 8 sublanes for 4-byte x, 16 for 2-byte (bf16).
    gran = 8 if x.dtype.itemsize >= 4 else 16
    # Cap TB at ceil(B/2) so the "parallel" batch axis gives >= 2 grid steps
    # (one per TensorCore on v7x) whenever the batch allows it.
    TB = max(gran, min(block_b, _round_up(max(pl.cdiv(B, 2), 1), gran)))
    grid = (pl.cdiv(B, TB),)   # ragged last tile: stores are masked by Pallas

    flops = 2 * B * (I * Hp + Hp * O)
    bytes_accessed = (B * I * x.dtype.itemsize
                      + I * Hp * w1p.dtype.itemsize
                      + Hp * b1p.dtype.itemsize
                      + Hp * O * w2p.dtype.itemsize
                      + O * b2p.dtype.itemsize
                      + B * O * 4)

    return pl.pallas_call(
        _qnet_kernel,
        out_shape=jax.ShapeDtypeStruct((B, O), jnp.float32),
        grid=grid,
        in_specs=[
            pl.BlockSpec((TB, I), lambda i: (i, 0)),    # x tile: pipelined
            pl.BlockSpec((I, Hp), lambda i: (0, 0)),    # W1: VMEM-resident
            pl.BlockSpec((1, Hp), lambda i: (0, 0)),    # b1
            pl.BlockSpec((Hp, O), lambda i: (0, 0)),    # W2
            pl.BlockSpec((1, O), lambda i: (0, 0)),     # b2
        ],
        out_specs=pl.BlockSpec((TB, O), lambda i: (i, 0)),
        compiler_params=pltpu.CompilerParams(
            dimension_semantics=("parallel",)),
        cost_estimate=pl.CostEstimate(
            flops=flops, transcendentals=0, bytes_accessed=bytes_accessed),
    )(x, w1p, b1p, w2p, b2p)


def init_params(key, input_size, hidden_size, output_size):
    """PyTorch nn.Linear-style init: U(-1/sqrt(fan_in), 1/sqrt(fan_in)).

    Stored as (in_features, out_features) = transpose of torch layout.
    """
    k1, k2, k3, k4 = jax.random.split(key, 4)
    bound1 = 1.0 / jnp.sqrt(input_size)
    bound2 = 1.0 / jnp.sqrt(hidden_size)
    w1 = jax.random.uniform(k1, (input_size, hidden_size), jnp.float32,
                            -bound1, bound1)
    b1 = jax.random.uniform(k2, (1, hidden_size), jnp.float32, -bound1, bound1)
    w2 = jax.random.uniform(k3, (hidden_size, output_size), jnp.float32,
                            -bound2, bound2)
    b2 = jax.random.uniform(k4, (1, output_size), jnp.float32, -bound2, bound2)
    return w1, b1, w2, b2


def pad_params(w1, b1, w2, b2, param_dtype=jnp.float32):
    """Zero-pad only the hidden dim up to a multiple of 128 lanes, once.

    Exact: padded hidden units get weight 0 / bias 0 (relu(0)=0) and zero W2
    rows, so they contribute nothing to the output.  Input and output dims
    stay unpadded.  Weights may be stored bf16; biases stay f32.
    """
    H = w1.shape[1]
    Hp = _round_up(H, LANE)
    w1p = jnp.pad(w1, ((0, 0), (0, Hp - H))).astype(param_dtype)
    b1p = jnp.pad(b1, ((0, 0), (0, Hp - H)))                 # f32
    w2p = jnp.pad(w2, ((0, Hp - H), (0, 0))).astype(param_dtype)
    b2p = b2                                                 # f32
    return w1p, b1p, w2p, b2p


def reference_forward(x, w1, b1, w2, b2):
    h = jnp.maximum(x @ w1 + b1, 0.0)
    return h @ w2 + b2


def reference_forward_mixed(x, w1, b1, w2, b2):
    """Mixed-precision reference matching the kernel's bf16-operand path."""
    h = jnp.dot(x, w1, preferred_element_type=jnp.float32) + b1
    h = jnp.maximum(h, 0.0)
    return jnp.dot(h.astype(w2.dtype), w2,
                   preferred_element_type=jnp.float32) + b2


if __name__ == "__main__":
    # Small shapes consistent with the DQN snake use-case.
    input_size, hidden_size, output_size = 16, 32, 4

    key = jax.random.PRNGKey(0)
    kx1, kx2, kx3, kp = jax.random.split(key, 4)
    w1, b1, w2, b2 = init_params(kp, input_size, hidden_size, output_size)

    # ---------------- f32 path (matches the PyTorch reference) -------------
    w1p, b1p, w2p, b2p = pad_params(w1, b1, w2, b2)

    # Case 1: tiny inference-style batch (single grid step).
    x_small = jax.random.normal(kx1, (8, input_size), jnp.float32)
    out_small = jax.block_until_ready(
        linear_qnet_forward(x_small, w1p, b1p, w2p, b2p))
    ref_small = reference_forward(x_small, w1, b1, w2, b2)
    assert out_small.shape == (8, output_size)
    assert jnp.allclose(out_small, ref_small, atol=1e-5, rtol=1e-5)

    # Case 2: replay-buffer-style batch, not a multiple of the tile size ->
    # two grid steps (one per TensorCore on v7x) with a ragged, store-masked
    # last tile; no batch padding, no output slicing.
    x_large = jax.random.normal(kx2, (1000, input_size), jnp.float32)
    out_large = jax.block_until_ready(
        linear_qnet_forward(x_large, w1p, b1p, w2p, b2p))
    ref_large = reference_forward(x_large, w1, b1, w2, b2)
    assert out_large.shape == (1000, output_size)
    assert jnp.allclose(out_large, ref_large, atol=1e-5, rtol=1e-5)

    # --------- bf16-operand path (halves x HBM stream; f32 accumulation) ---
    w1b, b1b, w2b, b2b = pad_params(w1, b1, w2, b2, param_dtype=jnp.bfloat16)
    x_bf = jax.random.normal(
        kx3, (512, input_size), jnp.float32).astype(jnp.bfloat16)
    out_bf = jax.block_until_ready(
        linear_qnet_forward(x_bf, w1b, b1b, w2b, b2b))
    ref_bf = reference_forward_mixed(x_bf, w1.astype(jnp.bfloat16), b1,
                                     w2.astype(jnp.bfloat16), b2)
    assert out_bf.shape == (512, output_size)
    assert jnp.allclose(out_bf, ref_bf, atol=2e-2, rtol=2e-2)

    print("KERNEL_OK")
</pallas_src>

<mosaic_0001>
module attributes {stable_mosaic.version = 11 : i64} {
  func.func @_qnet_kernel(%arg0: i32, %arg1: memref<8x16xf32, #tpu.memory_space<vmem>>, %arg2: memref<16x128xf32, #tpu.memory_space<vmem>>, %arg3: memref<1x128xf32, #tpu.memory_space<vmem>>, %arg4: memref<128x4xf32, #tpu.memory_space<vmem>>, %arg5: memref<1x4xf32, #tpu.memory_space<vmem>>, %arg6: memref<8x4xf32, #tpu.memory_space<vmem>>) attributes {dimension_semantics = [#tpu.dimension_semantics<parallel>], iteration_bounds = array<i64: 1>, scalar_prefetch = 0 : i64, scratch_operands = 0 : i64, tpu.core_type = #tpu.core_type<tc>, window_params = [{transform_indices = @transform_0, window_bounds = array<i64: 8, 16>}, {pipeline_mode = #tpu.pipeline_mode<synchronous>, transform_indices = @transform_1, window_bounds = array<i64: 16, 128>}, {pipeline_mode = #tpu.pipeline_mode<synchronous>, transform_indices = @transform_2, window_bounds = array<i64: 1, 128>}, {pipeline_mode = #tpu.pipeline_mode<synchronous>, transform_indices = @transform_3, window_bounds = array<i64: 128, 4>}, {pipeline_mode = #tpu.pipeline_mode<synchronous>, transform_indices = @transform_4, window_bounds = array<i64: 1, 4>}, {transform_indices = @transform_5, window_bounds = array<i64: 8, 4>}]} {
    %c0 = arith.constant 0 : index
    %c0_0 = arith.constant 0 : index
    %0 = vector.load %arg1[%c0, %c0_0] : memref<8x16xf32, #tpu.memory_space<vmem>>, vector<8x16xf32>
    %c0_1 = arith.constant 0 : index
    %c0_2 = arith.constant 0 : index
    %1 = vector.load %arg2[%c0_1, %c0_2] : memref<16x128xf32, #tpu.memory_space<vmem>>, vector<16x128xf32>
    %cst = arith.constant dense<0.000000e+00> : vector<8x128xf32>
    %2 = tpu.matmul %0, %1, %cst {dimension_numbers = #tpu.dot_dimension_numbers<[1], [0], [0], [1], [0, 0, 1, 1], [], []>} : vector<8x16xf32>, vector<16x128xf32>, vector<8x128xf32> -> vector<8x128xf32>
    %c0_3 = arith.constant 0 : index
    %c0_4 = arith.constant 0 : index
    %3 = vector.load %arg3[%c0_3, %c0_4] : memref<1x128xf32, #tpu.memory_space<vmem>>, vector<1x128xf32>
    %4 = vector.broadcast %3 : vector<1x128xf32> to vector<8x128xf32>
    %5 = arith.addf %2, %4 : vector<8x128xf32>
    %cst_5 = arith.constant 0.000000e+00 : f32
    %6 = vector.broadcast %cst_5 : f32 to vector<8x128xf32>
    %7 = arith.maximumf %5, %6 : vector<8x128xf32>
    %c0_6 = arith.constant 0 : index
    %c0_7 = arith.constant 0 : index
    %8 = vector.load %arg4[%c0_6, %c0_7] : memref<128x4xf32, #tpu.memory_space<vmem>>, vector<128x4xf32>
    %cst_8 = arith.constant dense<0.000000e+00> : vector<8x4xf32>
    %9 = tpu.matmul %7, %8, %cst_8 {dimension_numbers = #tpu.dot_dimension_numbers<[1], [0], [0], [1], [0, 0, 1, 1], [], []>} : vector<8x128xf32>, vector<128x4xf32>, vector<8x4xf32> -> vector<8x4xf32>
    %c0_9 = arith.constant 0 : index
    %c0_10 = arith.constant 0 : index
    %10 = vector.load %arg5[%c0_9, %c0_10] : memref<1x4xf32, #tpu.memory_space<vmem>>, vector<1x4xf32>
    %11 = vector.broadcast %10 : vector<1x4xf32> to vector<8x4xf32>
    %12 = arith.addf %9, %11 : vector<8x4xf32>
    %c0_11 = arith.constant 0 : index
    %c0_12 = arith.constant 0 : index
    %13 = vector.load %arg6[%c0_11, %c0_12] : memref<8x4xf32, #tpu.memory_space<vmem>>, vector<8x4xf32>
    tpu.vector_store %arg6[%c0_11, %c0_12], %12 {strides = array<i32>} : memref<8x4xf32, #tpu.memory_space<vmem>>, vector<8x4xf32>,
    return
  }
  func.func @transform_0(%arg0: i32) -> (i32, i32) {
    %c0_i32 = arith.constant 0 : i32
    %c0_i32_0 = arith.constant 0 : i32
    return %arg0, %c0_i32 : i32, i32
  }
  func.func @transform_1(%arg0: i32) -> (i32, i32) {
    %c0_i32 = arith.constant 0 : i32
    %c0_i32_0 = arith.constant 0 : i32
    %c0_i32_1 = arith.constant 0 : i32
    return %c0_i32, %c0_i32_0 : i32, i32
  }
  func.func @transform_2(%arg0: i32) -> (i32, i32) {
    %c0_i32 = arith.constant 0 : i32
    %c0_i32_0 = arith.constant 0 : i32
    %c0_i32_1 = arith.constant 0 : i32
    return %c0_i32, %c0_i32_0 : i32, i32
  }
  func.func @transform_3(%arg0: i32) -> (i32, i32) {
    %c0_i32 = arith.constant 0 : i32
    %c0_i32_0 = arith.constant 0 : i32
    %c0_i32_1 = arith.constant 0 : i32
    return %c0_i32, %c0_i32_0 : i32, i32
  }
  func.func @transform_4(%arg0: i32) -> (i32, i32) {
    %c0_i32 = arith.constant 0 : i32
    %c0_i32_0 = arith.constant 0 : i32
    %c0_i32_1 = arith.constant 0 : i32
    return %c0_i32, %c0_i32_0 : i32, i32
  }
  func.func @transform_5(%arg0: i32) -> (i32, i32) {
    %c0_i32 = arith.constant 0 : i32
    %c0_i32_0 = arith.constant 0 : i32
    return %arg0, %c0_i32 : i32, i32
  }
}

</mosaic_0001>

<llo_original>
// kernel: linear_qnet_forward.1
$region0: #{linear_qnet_forward.1}
  #allocation0 [shape = 'u32[]', space=smem, size = 0x4, offset = 0x4, fixed_abs, tag = 'smem constant byte address 0x4 - core index']
  #allocation1 [shape = 'u32[72,128]{1,0:T(1,128)}', space=vmem, size = 0x9000, scoped, tag = 'internal scratch']
  %s0 = inlined_call_operand.vmem [shape: f32[8,16], index: 0, kind: input, shape index: {}]
  %s1 = inlined_call_operand.vmem [shape: f32[16,128], index: 1, kind: input, shape index: {}]
  %s2 = inlined_call_operand.vmem [shape: f32[1,128], index: 2, kind: input, shape index: {}]
  %s3 = inlined_call_operand.vmem [shape: f32[128,4], index: 3, kind: input, shape index: {}]
  %s4 = inlined_call_operand.vmem [shape: f32[1,4], index: 4, kind: input, shape index: {}]
  %s5 = inlined_call_operand.vmem [shape: f32[8,4], index: 5, kind: output, shape index: {}]
  %s6 = sld [smem:[#allocation0]]
  $region30: #{linear_qnet_forward.1} parent=0
    _
  %s8 = ssub.s32 1, %s6
  %s9 = scalar_select 0, %s8, %s6
  // Predicated region
  $region2: #{linear_qnet_forward.1} parent=0 // pred_check
    _
  $region3: #{linear_qnet_forward.1} parent=0 // pred_check_branch
    %11 = sbr.rel (0) target = $region5
  $region4: #{linear_qnet_forward.1} parent=0 // pred_region
    _
  $region5: #{linear_qnet_forward.1} parent=0 // pred_fallthru
    _
  // Predicated region
  $region6: #{linear_qnet_forward.1} parent=0 // pred_check
    _
  $region7: #{linear_qnet_forward.1} parent=0 // pred_check_branch
    %13 = sbr.rel (0) target = $region9
  $region8: #{linear_qnet_forward.1} parent=0 // pred_region
    _
  $region9: #{linear_qnet_forward.1} parent=0 // pred_fallthru
    _
  // Predicated region
  $region10: #{linear_qnet_forward.1} parent=0 // pred_check
    _
  $region11: #{linear_qnet_forward.1} parent=0 // pred_check_branch
    %15 = sbr.rel (0) target = $region13
  $region12: #{linear_qnet_forward.1} parent=0 // pred_region
    _
  $region13: #{linear_qnet_forward.1} parent=0 // pred_fallthru
    _
  // Predicated region
  $region14: #{linear_qnet_forward.1} parent=0 // pred_check
    _
  $region15: #{linear_qnet_forward.1} parent=0 // pred_check_branch
    %17 = sbr.rel (0) target = $region17
  $region16: #{linear_qnet_forward.1} parent=0 // pred_region
    _
  $region17: #{linear_qnet_forward.1} parent=0 // pred_fallthru
    _
  // Predicated region
  $region18: #{linear_qnet_forward.1} parent=0 // pred_check
    _
  $region19: #{linear_qnet_forward.1} parent=0 // pred_check_branch
    %19 = sbr.rel (0) target = $region21
  $region20: #{linear_qnet_forward.1} parent=0 // pred_region
    _
  $region21: #{linear_qnet_forward.1} parent=0 // pred_fallthru
    _
  %v20 = vld [vmem:[%s0] sm:$0xff]
  %v21 = vld [vmem:[%s1] sm:$0xff]
  %v22 = vld [vmem:[%s1 + $0x8] sm:$0xff]
  %v23 = vld [vmem:[%s2] sm:$0x1]
  %v25 = vperm.slane %v23, 0
  %vm27 = vcmask 130048
  %v29 = vsel %vm27, %v20, 0
  %31 = vmatpush.msra.mxu0 0.0
  %32 = vmatpush.msra.mxu0 0.0
  %33 = vmatpush.msra.mxu0 0.0
  %34 = vmatpush.msra.mxu0 0.0
  %35 = vmatpush.msra.mxu0 0.0
  %36 = vmatpush.msra.mxu0 0.0
  %37 = vmatpush.msra.mxu0 0.0
  %38 = vmatpush.msra.mxu0 0.0
  %39 = vmatpush.msra.mxu0 0.0
  %40 = vmatpush.msra.mxu0 0.0
  %41 = vmatpush.msra.mxu0 0.0
  %42 = vmatpush.msra.mxu0 0.0
  %43 = vmatpush.msra.mxu0 0.0
  %44 = vmatpush.msra.mxu0 0.0
  %45 = vmatpush.msra.mxu0 %v22
  %46 = vmatpush.msra.mxu0 %v21
  %47 = vmatmul.f32.gmra.mxu0 %v29
  %v48 = vpop.f32.mrf.mxu0
  %v49 = vadd.f32 %v25, %v48
  %50 = vdwg.mxu0
  %v51 = vmax.f32 %v49, 0.0
  %v52 = vld [vmem:[%s3] sm:$0xff]
  %v53 = vld [vmem:[%s3 + $0x8] sm:$0xff]
  %v54 = vld [vmem:[%s3 + $0x10] sm:$0xff]
  %v55 = vld [vmem:[%s3 + $0x18] sm:$0xff]
  %v56 = vld [vmem:[%s3 + $0x20] sm:$0xff]
  %v57 = vld [vmem:[%s3 + $0x28] sm:$0xff]
  %v58 = vld [vmem:[%s3 + $0x30] sm:$0xff]
  %v59 = vld [vmem:[%s3 + $0x38] sm:$0xff]
  %v60 = vld [vmem:[%s3 + $0x40] sm:$0xff]
  %v61 = vld [vmem:[%s3 + $0x48] sm:$0xff]
  %v62 = vld [vmem:[%s3 + $0x50] sm:$0xff]
  %v63 = vld [vmem:[%s3 + $0x58] sm:$0xff]
  %v64 = vld [vmem:[%s3 + $0x60] sm:$0xff]
  %v65 = vld [vmem:[%s3 + $0x68] sm:$0xff]
  %v66 = vld [vmem:[%s3 + $0x70] sm:$0xff]
  %v67 = vld [vmem:[%s3 + $0x78] sm:$0xff]
  %v68 = vld [vmem:[%s4] sm:$0x1]
  %v70 = vperm.slane %v68, 0
  %72 = vmatpush.msra.mxu0 %v67
  %73 = vmatpush.msra.mxu0 %v66
  %74 = vmatpush.msra.mxu0 %v65
  %75 = vmatpush.msra.mxu0 %v64
  %76 = vmatpush.msra.mxu0 %v63
  %77 = vmatpush.msra.mxu0 %v62
  %78 = vmatpush.msra.mxu0 %v61
  %79 = vmatpush.msra.mxu0 %v60
  %80 = vmatpush.msra.mxu0 %v59
  %81 = vmatpush.msra.mxu0 %v58
  %82 = vmatpush.msra.mxu0 %v57
  %83 = vmatpush.msra.mxu0 %v56
  %84 = vmatpush.msra.mxu0 %v55
  %85 = vmatpush.msra.mxu0 %v54
  %86 = vmatpush.msra.mxu0 %v53
  %87 = vmatpush.msra.mxu0 %v52
  %88 = vmatmul.f32.gmra.mxu0 %v51
  %v89 = vpop.f32.mrf.mxu0
  %v90 = vadd.f32 %v70, %v89
  %91 = vdwg.mxu0
  %vm92 = vcmask 31744
  %93 = vst.msk [vmem:[%s5] sm:$0xff] %vm92, %v90
  // Predicated region
  $region22: #{linear_qnet_forward.1} parent=0 // pred_check
    _
  $region23: #{linear_qnet_forward.1} parent=0 // pred_check_branch
    %95 = sbr.rel (0) target = $region25
  $region24: #{linear_qnet_forward.1} parent=0 // pred_region
    _
  $region25: #{linear_qnet_forward.1} parent=0 // pred_fallthru
    _
  // Predicated region
  $region26: #{linear_qnet_forward.1} parent=0 // pred_check
    _
  $region27: #{linear_qnet_forward.1} parent=0 // pred_check_branch
    %97 = sbr.rel (0) target = $region29
  $region28: #{linear_qnet_forward.1} parent=0 // pred_region
    _
  $region29: #{linear_qnet_forward.1} parent=0 // pred_fallthru
    _

</llo_original>
